<compile_context>
chip_gen: v7x
topology: tpu7x:2x2x1
jax: 0.10.0
libtpu: 0.0.40
codegen_flags: <defaults>
</compile_context>

<pallas_src>
import functools

import jax
import jax.numpy as jnp
from jax.experimental import pallas as pl
from jax.experimental.pallas import tpu as pltpu


# -----------------------------------------------------------------------------
# Pallas kernel
# -----------------------------------------------------------------------------
def _rmsnorm_kernel(x_ref, w_ref, o_ref, *, eps):
    """RMSNorm over the last axis of a (tm, H) row tile.

    x_ref: (tm, H) tile of flattened tokens
    w_ref: (1, H)  learned scale (resident; constant index_map)
    o_ref: (tm, H) output tile (input dtype)
    """
    x = x_ref[...].astype(jnp.float32)                 # norm math always in f32
    var = jnp.mean(x * x, axis=-1, keepdims=True)
    y = x * jax.lax.rsqrt(var + eps)
    # Match torch: normalized value is cast back to the input dtype *before*
    # being scaled by the (f32) weight; result stored in the input dtype.
    y = y.astype(o_ref.dtype).astype(jnp.float32)
    o_ref[...] = (w_ref[...].astype(jnp.float32) * y).astype(o_ref.dtype)


# -----------------------------------------------------------------------------
# Tile / VMEM sizing helpers
# -----------------------------------------------------------------------------
def _round_up(a, b):
    return (a + b - 1) // b * b


def _vmem_budget_bytes():
    """Per-generation budget for the tile working set (conservative fallback)."""
    try:
        info = pltpu.get_tpu_info()
        vmem = getattr(info, "vmem_capacity_bytes", None)
    except Exception:
        vmem = None
    if vmem is None:
        return 12 << 20
    if vmem >= (96 << 20):
        # v5e / v6e class (128 MiB physical VMEM).  The explicit
        # vmem_limit_bytes below lets us exceed the 16/32 MiB scoped defaults.
        return 24 << 20
    # v7x class: 64 MiB shared by 2 TensorCores -> keep per-TC working set modest.
    return 14 << 20


def _choose_row_tile(n_rows, hidden, itemsize, vmem_budget_bytes):
    """Largest power-of-two row tile (<=1024) whose double-buffered in/out tiles
    plus the in-kernel f32 intermediates fit the VMEM budget, capped so the grid
    has at least ~4 balanced tiles (v7x 2-TC split)."""
    # sublane minimum depends on dtype packing: f32 -> 8, bf16 -> 16, int8 -> 32
    sublane = max(8, 32 // max(itemsize, 1))
    # Per-row working-set bytes:
    #   2x double-buffered input tile + 2x output tile (input dtype)
    #   + f32 upcast intermediates inside the body for sub-f32 inputs
    per_row = 4 * hidden * itemsize
    if itemsize < 4:
        per_row += 2 * hidden * 4
    tm = 1024
    while tm > sublane and tm * per_row > vmem_budget_bytes:
        tm //= 2
    tm = max(tm, sublane)
    # Never larger than the (sublane-rounded) row count.
    tm = min(tm, _round_up(n_rows, sublane))
    # Guarantee >= ~4 row tiles so both v7x TensorCores get balanced work
    # (negligible extra grid-step overhead on single-TC v5e/v6e).
    tm = min(tm, _round_up(pl.cdiv(n_rows, 4), sublane))
    return max(tm, sublane)


# -----------------------------------------------------------------------------
# Wrapper
# -----------------------------------------------------------------------------
def rmsnorm(hidden_states, weight, *, eps=1e-6, interpret=False):
    """RMSNorm over the last dim of `hidden_states`, scaled by `weight`."""
    orig_shape = hidden_states.shape
    H = orig_shape[-1]
    x2d = hidden_states.reshape(-1, H)
    N = x2d.shape[0]
    itemsize = jnp.dtype(hidden_states.dtype).itemsize
    w_itemsize = jnp.dtype(weight.dtype).itemsize

    # TODO(synk): for H not a multiple of 128 (e.g. the small smoke test) the
    # output stores are lane-masked (vst.msk); real deployments should keep
    # hidden_size % 128 == 0 (or repack rows into the lane axis).

    budget = _vmem_budget_bytes()
    tm = _choose_row_tile(N, H, itemsize, budget)
    grid = (pl.cdiv(N, tm),)          # partial edge block is masked by Pallas

    # Explicit VMEM limit from the actual working set (+50% headroom + 1 MiB),
    # decoupled from per-generation scoped defaults.
    io_bytes = 4 * tm * H * itemsize                    # 2x in + 2x out tiles
    temp_bytes = (2 * tm * H * 4) if itemsize < 4 else 0
    w_bytes = 2 * H * w_itemsize
    vmem_limit = (io_bytes + temp_bytes + w_bytes) * 3 // 2 + (1 << 20)
    vmem_limit = int(max(4 << 20, min(vmem_limit, 48 << 20)))

    w2d = weight.reshape(1, H)

    cost = pl.CostEstimate(
        flops=4 * N * H,                     # square, mean-acc, scale, gamma-mul
        transcendentals=N,                   # one rsqrt per row
        bytes_accessed=2 * N * H * itemsize + H * w_itemsize,
    )

    out = pl.pallas_call(
        functools.partial(_rmsnorm_kernel, eps=eps),
        out_shape=jax.ShapeDtypeStruct((N, H), hidden_states.dtype),
        grid_spec=pltpu.PrefetchScalarGridSpec(
            num_scalar_prefetch=0,
            grid=grid,
            in_specs=[
                pl.BlockSpec((tm, H), lambda i: (i, 0)),   # row tile
                pl.BlockSpec((1, H), lambda i: (0, 0)),    # gamma (resident)
            ],
            out_specs=pl.BlockSpec((tm, H), lambda i: (i, 0)),
        ),
        compiler_params=pltpu.CompilerParams(
            dimension_semantics=("parallel",),             # megacore / 2-TC split
            vmem_limit_bytes=vmem_limit,
        ),
        cost_estimate=cost,
        interpret=interpret,
    )(x2d, w2d)

    return out.reshape(orig_shape)


# -----------------------------------------------------------------------------
# Pure-JAX reference (mirrors the PyTorch module exactly)
# -----------------------------------------------------------------------------
def reference_rmsnorm(hidden_states, weight, eps=1e-6):
    xf = hidden_states.astype(jnp.float32)
    var = jnp.mean(xf * xf, axis=-1, keepdims=True)
    y = xf * jax.lax.rsqrt(var + eps)
    y = y.astype(hidden_states.dtype).astype(jnp.float32)
    return (weight.astype(jnp.float32) * y).astype(hidden_states.dtype)


# -----------------------------------------------------------------------------
# Main
# -----------------------------------------------------------------------------
if __name__ == "__main__":
    key = jax.random.PRNGKey(0)
    k1, k2, k3, k4, k5, k6 = jax.random.split(key, 6)

    # Small shape consistent with the module's forward: [batch, seq, hidden].
    B, S, H = 2, 8, 32
    x = jax.random.normal(k1, (B, S, H), dtype=jnp.float32)
    weight = 1.0 + 0.1 * jax.random.normal(k2, (H,), dtype=jnp.float32)

    out = rmsnorm(x, weight)
    jax.block_until_ready(out)
    ref = reference_rmsnorm(x, weight)
    assert out.shape == x.shape
    assert jnp.allclose(out, ref, atol=1e-5, rtol=1e-5)

    # Second case: lane-aligned hidden, multi-tile grid with a *partial* last
    # row block (N = 771 not divisible by the chosen tile) -> exercises Pallas
    # edge-block masking with no pad/slice round-trip.
    B2, S2, H2 = 3, 257, 128
    x2 = jax.random.normal(k3, (B2, S2, H2), dtype=jnp.float32)
    w2 = 1.0 + 0.1 * jax.random.normal(k4, (H2,), dtype=jnp.float32)

    out2 = rmsnorm(x2, w2)
    jax.block_until_ready(out2)
    ref2 = reference_rmsnorm(x2, w2)
    assert out2.shape == x2.shape
    assert jnp.allclose(out2, ref2, atol=1e-5, rtol=1e-5)

    # Third case: bf16 input (f32 intermediates + cast-before-gamma path).
    B3, S3, H3 = 2, 37, 256
    x3 = jax.random.normal(k5, (B3, S3, H3), dtype=jnp.float32).astype(jnp.bfloat16)
    w3 = (1.0 + 0.1 * jax.random.normal(k6, (H3,), dtype=jnp.float32))

    out3 = rmsnorm(x3, w3)
    jax.block_until_ready(out3)
    ref3 = reference_rmsnorm(x3, w3)
    assert out3.shape == x3.shape
    assert jnp.allclose(out3.astype(jnp.float32), ref3.astype(jnp.float32),
                        atol=2e-2, rtol=2e-2)

    print("KERNEL_OK")
</pallas_src>

<mosaic_0001>
module attributes {stable_mosaic.version = 11 : i64} {
  func.func @_rmsnorm_kernel(%arg0: i32, %arg1: memref<8x32xf32, #tpu.memory_space<vmem>>, %arg2: memref<1x32xf32, #tpu.memory_space<vmem>>, %arg3: memref<8x32xf32, #tpu.memory_space<vmem>>) attributes {dimension_semantics = [#tpu.dimension_semantics<parallel>], iteration_bounds = array<i64: 2>, scalar_prefetch = 0 : i64, scratch_operands = 0 : i64, tpu.core_type = #tpu.core_type<tc>, window_params = [{transform_indices = @transform_0, window_bounds = array<i64: 8, 32>}, {pipeline_mode = #tpu.pipeline_mode<synchronous>, transform_indices = @transform_1, window_bounds = array<i64: 1, 32>}, {transform_indices = @transform_2, window_bounds = array<i64: 8, 32>}]} {
    %c0 = arith.constant 0 : index
    %c0_0 = arith.constant 0 : index
    %0 = vector.load %arg1[%c0, %c0_0] : memref<8x32xf32, #tpu.memory_space<vmem>>, vector<8x32xf32>
    %1 = arith.mulf %0, %0 : vector<8x32xf32>
    %cst = arith.constant dense<0.000000e+00> : vector<8xf32>
    %2 = vector.multi_reduction <add>, %1, %cst [1] : vector<8x32xf32> to vector<8xf32>
    %3 = vector.shape_cast %2 : vector<8xf32> to vector<8x1xf32>
    %cst_1 = arith.constant 3.200000e+01 : f32
    %4 = vector.broadcast %cst_1 : f32 to vector<8x1xf32>
    %5 = arith.divf %3, %4 : vector<8x1xf32>
    %cst_2 = arith.constant 9.99999997E-7 : f32
    %6 = vector.broadcast %cst_2 : f32 to vector<8x1xf32>
    %7 = arith.addf %5, %6 : vector<8x1xf32>
    %8 = math.rsqrt %7 : vector<8x1xf32>
    %9 = vector.broadcast %8 : vector<8x1xf32> to vector<8x32xf32>
    %10 = arith.mulf %0, %9 : vector<8x32xf32>
    %c0_3 = arith.constant 0 : index
    %c0_4 = arith.constant 0 : index
    %11 = vector.load %arg2[%c0_3, %c0_4] : memref<1x32xf32, #tpu.memory_space<vmem>>, vector<1x32xf32>
    %12 = vector.broadcast %11 : vector<1x32xf32> to vector<8x32xf32>
    %13 = arith.mulf %12, %10 : vector<8x32xf32>
    %c0_5 = arith.constant 0 : index
    %c0_6 = arith.constant 0 : index
    %14 = vector.load %arg3[%c0_5, %c0_6] : memref<8x32xf32, #tpu.memory_space<vmem>>, vector<8x32xf32>
    tpu.vector_store %arg3[%c0_5, %c0_6], %13 {strides = array<i32>} : memref<8x32xf32, #tpu.memory_space<vmem>>, vector<8x32xf32>,
    return
  }
  func.func @transform_0(%arg0: i32) -> (i32, i32) {
    %c0_i32 = arith.constant 0 : i32
    %c0_i32_0 = arith.constant 0 : i32
    return %arg0, %c0_i32 : i32, i32
  }
  func.func @transform_1(%arg0: i32) -> (i32, i32) {
    %c0_i32 = arith.constant 0 : i32
    %c0_i32_0 = arith.constant 0 : i32
    %c0_i32_1 = arith.constant 0 : i32
    return %c0_i32, %c0_i32_0 : i32, i32
  }
  func.func @transform_2(%arg0: i32) -> (i32, i32) {
    %c0_i32 = arith.constant 0 : i32
    %c0_i32_0 = arith.constant 0 : i32
    return %arg0, %c0_i32 : i32, i32
  }
}

</mosaic_0001>

<llo_original>
// kernel: tpu_custom_call.1
$region0: #{tpu_custom_call.1}
  #allocation0 [shape = 'u32[]', space=smem, size = 0x4, offset = 0x4, fixed_abs, tag = 'smem constant byte address 0x4 - core index']
  #allocation1 [shape = 'u32[144,128]{1,0:T(1,128)}', space=vmem, size = 0x12000, scoped, tag = 'internal scratch']
  %s0 = inlined_call_operand.hbm [shape: f32[16,32], index: 0, kind: input, shape index: {}]
  %s1 = inlined_call_operand.vmem [shape: f32[1,32], index: 1, kind: input, shape index: {}]
  %s2 = inlined_call_operand.hbm [shape: f32[16,32], index: 2, kind: output, shape index: {}]
  %s3 = sld [smem:[#allocation0]]
  $region45: #{tpu_custom_call.1} parent=0
    _
  %s5 = ssub.s32 1, %s3
  %s6 = scalar_select 0, %s5, %s3
  $region1: #{tpu_custom_call.1} parent=0
    #allocation2 [shape = 'u8[8192]{0}', space=vmem, size = 0x2000, scoped, tag = 'input window, operand 0']
    #allocation3 [shape = 's32[2]{0}', space=sflag, size = 0x8, scoped, tag = 'scoped memory for tpu_custom_call.1']
    #allocation4 [shape = 's32[2]{0}', space=sflag, size = 0x8, scoped, tag = 'scoped memory for tpu_custom_call.1']
    #allocation5 [shape = 'u8[8192]{0}', space=vmem, size = 0x2000, scoped, tag = 'output window, operand 0']
    %7 = vsyncpa [#allocation3], 0
    %s8 = scalar_lea.sflag [#allocation3], 1
    %9 = vsyncpa %s8, 0
    %10 = vsyncpa [#allocation4], 0
    %s11 = scalar_lea.sflag [#allocation4], 1
    %12 = vsyncpa %s11, 0
    loop: start=0, step=1, limit=4
    $region2: #{tpu_custom_call.1} parent=1 // loop_pre_header
      _
    $region3: #{tpu_custom_call.1} parent=1 // loop_header
      %s14 = sphi 0, %s18
      %p15 = scmp.ge.s32.totalorder %s14, 4
      %s24 = sphi 0, %s26
      %s27 = sphi 0, %s24
      %s28 = sphi 0, %s27
      %s44 = sphi 0, %s28
      %s48 = sphi 0, %s48
      %s50 = sphi 0, %s48
      %s51 = sphi 0, %s50
      %s65 = sphi 0, %s51
      %s71 = sphi 0, %s73
      %s74 = sphi 0, %s71
      %s75 = sphi 0, %s74
      %s91 = sphi 0, %s75
    $region4: #{tpu_custom_call.1} parent=1 // loop_header_branch
      %17 = sbr.rel (%p15) target = $region8
    $region5: #{tpu_custom_call.1} parent=1 // loop_body
      %s19 = ssub.s32 %s14, 1
      %s20 = ssub.s32 %s14, 2
      %s21 = sadd.s32 %s14, 1
      %s22 = ssub.s32 %s14, %s21
      %p23 = scmp.eq.s32.totalorder %s22, 0
      %s25 = sadd.s32 %s24, 1
      %s26 = scalar_select %p23, %s24, %s25
      %p29 = pneg %p23
      %p30 = scmp.eq.s32.totalorder %s14, 1
      %p31 = por %p29, %p30
      %p32 = scmp.ne.s32.totalorder %s24, %s27
      %p33 = scmp.eq.s32.totalorder %s14, 0
      %p34 = por %p32, %p33
      %p35 = scmp.ne.s32.totalorder %s24, %s27
      %p36 = scmp.eq.s32.totalorder %s19, 1
      %p37 = por %p35, %p36
      %p38 = scmp.ne.s32.totalorder %s27, %s28
      %p39 = scmp.eq.s32.totalorder %s19, 0
      %p40 = por %p38, %p39
      %p41 = scmp.ne.s32.totalorder %s27, %s28
      %p42 = scmp.eq.s32.totalorder %s20, 1
      %p43 = por %p41, %p42
      %p45 = scmp.ne.s32.totalorder %s28, %s44
      %p46 = scmp.eq.s32.totalorder %s20, 0
      %p47 = por %p45, %p46
      %s49 = sadd.s32 %s48, 1
      %p52 = scmp.eq.s32.totalorder %s14, 1
      %p53 = scmp.ne.s32.totalorder %s48, %s50
      %p54 = scmp.eq.s32.totalorder %s14, 0
      %p55 = por %p53, %p54
      %p56 = scmp.ne.s32.totalorder %s48, %s50
      %p57 = scmp.eq.s32.totalorder %s19, 1
      %p58 = por %p56, %p57
      %p59 = scmp.ne.s32.totalorder %s50, %s51
      %p60 = scmp.eq.s32.totalorder %s19, 0
      %p61 = por %p59, %p60
      %p62 = scmp.ne.s32.totalorder %s50, %s51
      %p63 = scmp.eq.s32.totalorder %s20, 1
      %p64 = por %p62, %p63
      %p66 = scmp.ne.s32.totalorder %s51, %s65
      %p67 = scmp.eq.s32.totalorder %s20, 0
      %p68 = por %p66, %p67
      %s69 = ssub.s32 %s14, %s21
      %p70 = scmp.eq.s32.totalorder %s69, 0
      %s72 = sadd.s32 %s71, 1
      %s73 = scalar_select %p70, %s71, %s72
      %p76 = pneg %p70
      %p77 = scmp.eq.s32.totalorder %s14, 1
      %p78 = por %p76, %p77
      %p79 = scmp.ne.s32.totalorder %s71, %s74
      %p80 = scmp.eq.s32.totalorder %s14, 0
      %p81 = por %p79, %p80
      %p82 = scmp.ne.s32.totalorder %s71, %s74
      %p83 = scmp.eq.s32.totalorder %s19, 1
      %p84 = por %p82, %p83
      %p85 = scmp.ne.s32.totalorder %s74, %s75
      %p86 = scmp.eq.s32.totalorder %s19, 0
      %p87 = por %p85, %p86
      %p88 = scmp.ne.s32.totalorder %s74, %s75
      %p89 = scmp.eq.s32.totalorder %s20, 1
      %p90 = por %p88, %p89
      %p92 = scmp.ne.s32.totalorder %s75, %s91
      %p93 = scmp.eq.s32.totalorder %s20, 0
      %p94 = por %p92, %p93
      %p95 = scmp.le.s32.totalorder 1, %s14
      %p96 = scmp.lt.s32.totalorder %s14, 3
      %p97 = pnand %p95, %p96
      %p98 = pneg %p97
      // Predicated region
      $region9: #{tpu_custom_call.1} parent=5 // pred_check
        _
      $region10: #{tpu_custom_call.1} parent=5 // pred_check_branch
        %100 = sbr.rel (%p97) target = $region12
      $region11: #{tpu_custom_call.1} parent=5 // pred_region
        %s101 = ssub.s32 %s14, 1
        // Predicated region
        $region13: #{tpu_custom_call.1} parent=11 // pred_check
          %p102 = pneg %p61
        $region14: #{tpu_custom_call.1} parent=11 // pred_check_branch
          %104 = sbr.rel (%p102) target = $region16
        $region15: #{tpu_custom_call.1} parent=11 // pred_region
          _
        $region16: #{tpu_custom_call.1} parent=11 // pred_fallthru
          _
      $region12: #{tpu_custom_call.1} parent=5 // pred_fallthru
        _
      %p105 = scmp.lt.s32.totalorder %s14, 2
      // Predicated region
      $region17: #{tpu_custom_call.1} parent=5 // pred_check
        %p106 = pneg %p105
      $region18: #{tpu_custom_call.1} parent=5 // pred_check_branch
        %108 = sbr.rel (%p106) target = $region20
      $region19: #{tpu_custom_call.1} parent=5 // pred_region
        // Predicated region
        $region21: #{tpu_custom_call.1} parent=19 // pred_check
          %p109 = pneg %p34
        $region22: #{tpu_custom_call.1} parent=19 // pred_check_branch
          %111 = sbr.rel (%p109) target = $region24
        $region23: #{tpu_custom_call.1} parent=19 // pred_region
          %s112 = sand.u32 %s24, 1
          %s113 = scalar_lea.sflag [#allocation3], %s112
          %s114 = sand.u32 %s24, 1
          %s115 = smul.addr %s114, 8
          %s116 = scalar_lea.vmem [#allocation2], %s115
          %s118 = ssub.s32 128, 128
          %119 = vsyncadd %s113, %s118
          %s120 = smul.addr %s14, 128
          %s121 = scalar_lea.hbm %s0, %s120
          %s123 = sshll.u32 %s116, 4
          %s124 = int_to_ptr.vmem [resolvable:$true] %s123
          %126 = dma.hbm_to_vmem [thread:$0]  %s121, 128, %s124, %s113
        $region24: #{tpu_custom_call.1} parent=19 // pred_fallthru
          _
      $region20: #{tpu_custom_call.1} parent=5 // pred_fallthru
        _
      %p127 = scmp.le.s32.totalorder 1, %s14
      %p128 = scmp.lt.s32.totalorder %s14, 3
      %p129 = pnand %p127, %p128
      %p130 = pneg %p129
      // Predicated region
      $region25: #{tpu_custom_call.1} parent=5 // pred_check
        _
      $region26: #{tpu_custom_call.1} parent=5 // pred_check_branch
        %132 = sbr.rel (%p129) target = $region28
      $region27: #{tpu_custom_call.1} parent=5 // pred_region
        %s133 = ssub.s32 %s14, 1
        %s134 = sand.u32 %s27, 1
        %s135 = scalar_lea.sflag [#allocation3], %s134
        %s136 = sand.u32 %s27, 1
        %s137 = smul.addr %s136, 8
        %s138 = scalar_lea.vmem [#allocation2], %s137
        // Predicated region
        $region29: #{tpu_custom_call.1} parent=27 // pred_check
          %p139 = pneg %p40
        $region30: #{tpu_custom_call.1} parent=27 // pred_check_branch
          %141 = sbr.rel (%p139) target = $region32
        $region31: #{tpu_custom_call.1} parent=27 // pred_region
          %142 = dma.done %s135, 128
        $region32: #{tpu_custom_call.1} parent=27 // pred_fallthru
          _
        %s143 = sand.u32 %s27, 1
        %s144 = scalar_lea.sflag [#allocation3], %s143
        %s145 = sand.u32 %s27, 1
        %s146 = smul.addr %s145, 8
        %s147 = scalar_lea.vmem [#allocation2], %s146
        %p148 = pneg %p40
        %p149 = pneg %p37
        %p150 = pneg %p61
        %p151 = pneg %p58
        %p152 = pneg %p87
        %p153 = pneg %p84
        %s154 = sand.u32 %s74, 1
        %s155 = scalar_lea.sflag [#allocation4], %s154
        %s156 = sand.u32 %s74, 1
        %s157 = smul.addr %s156, 8
        %s158 = scalar_lea.vmem [#allocation5], %s157
        %v159 = vld [vmem:[%s138] sm:$0xff]
        %v160 = vmul.f32 %v159, %v159
        %vm161 = vcmask 261120
        %v162 = vsel %vm161, %v160, 0.0
        %163 = vadd.xlane.f32.xlu0 %v162
        %v164 = vpop.xlane.xlu0 %163
        %v165 = vrcp.pop 32.0
        %v166 = vmul.f32 %v164, %v165
        %v167 = vadd.f32 %v166, 1e-06
        %v168 = vrsqrt.pop %v167
        %v169 = vmul.f32 %v159, %v168
        %v170 = vld [vmem:[%s1] sm:$0x1]
        %v172 = vlaneseq
        %v173 = vshrl.u32 %v172, 7
        %v174 = vsub.s32 0, %v173
        %v175 = vrot.slane %v170, %v174
        %v177 = vmul.f32 %v175, %v169
        %178 = vst.msk [vmem:[%s158] sm:$0xff] %vm161, %v177
        %s179 = sand.u32 %s74, 1
        %s180 = scalar_lea.sflag [#allocation4], %s179
        %s181 = sand.u32 %s74, 1
        %s182 = smul.addr %s181, 8
        %s183 = scalar_lea.vmem [#allocation5], %s182
        // Predicated region
        $region33: #{tpu_custom_call.1} parent=27 // pred_check
          %p184 = pneg %p84
        $region34: #{tpu_custom_call.1} parent=27 // pred_check_branch
          %186 = sbr.rel (%p184) target = $region36
        $region35: #{tpu_custom_call.1} parent=27 // pred_region
          %s188 = ssub.s32 128, 128
          %189 = vsyncadd %s180, %s188
          %s190 = smul.addr %s19, 128
          %s191 = scalar_lea.hbm %s2, %s190
          %s193 = sshll.u32 %s183, 4
          %s194 = int_to_ptr.vmem [resolvable:$true] %s193
          %196 = dma.vmem_to_hbm [thread:$0]  %s194, 128, %s191, %s180
        $region36: #{tpu_custom_call.1} parent=27 // pred_fallthru
          _
      $region28: #{tpu_custom_call.1} parent=5 // pred_fallthru
        _
      %p197 = scmp.le.s32.totalorder 2, %s14
      // Predicated region
      $region37: #{tpu_custom_call.1} parent=5 // pred_check
        %p198 = pneg %p197
      $region38: #{tpu_custom_call.1} parent=5 // pred_check_branch
        %200 = sbr.rel (%p198) target = $region40
      $region39: #{tpu_custom_call.1} parent=5 // pred_region
        %s201 = ssub.s32 %s14, 2
        // Predicated region
        $region41: #{tpu_custom_call.1} parent=39 // pred_check
          %p202 = pneg %p90
        $region42: #{tpu_custom_call.1} parent=39 // pred_check_branch
          %204 = sbr.rel (%p202) target = $region44
        $region43: #{tpu_custom_call.1} parent=39 // pred_region
          %s205 = sand.u32 %s75, 1
          %s206 = scalar_lea.sflag [#allocation4], %s205
          %s207 = sand.u32 %s75, 1
          %s208 = smul.addr %s207, 8
          %s209 = scalar_lea.vmem [#allocation5], %s208
          %210 = dma.done %s206, 128
        $region44: #{tpu_custom_call.1} parent=39 // pred_fallthru
          _
      $region40: #{tpu_custom_call.1} parent=5 // pred_fallthru
        _
    $region6: #{tpu_custom_call.1} parent=1 // loop_footer
      %s18 = sadd.s32 1, %s14
    $region7: #{tpu_custom_call.1} parent=1 // loop_footer_branch
      %13 = sbr.rel target = $region3
    $region8: #{tpu_custom_call.1} parent=1 // loop_exit
      _
    %211 = vsyncpa [#allocation3], 1
    %s212 = scalar_lea.sflag [#allocation3], 1
    %213 = vsyncpa %s212, 1
    %214 = vsyncpa [#allocation4], 1
    %s215 = scalar_lea.sflag [#allocation4], 1
    %216 = vsyncpa %s215, 1

</llo_original>
